<compile_context>
chip_gen: v5e
topology: v5e:2x2
jax: 0.10.0
libtpu: 0.0.40
codegen_flags: <defaults>
</compile_context>

<pallas_src>
import functools

import jax
import jax.numpy as jnp
from jax.experimental import pallas as pl
from jax.experimental.pallas import tpu as pltpu

# ----------------------------- model configuration -----------------------------
F_H_EMBED = 8            # node feature dim (EConv in_channels)
F_E_EMBED = 4            # edge feature dim
F_H_ECONV = 16           # EConv out_channels
F_H = 16                 # final node embedding dim
GAT_N_HEADS = 1
GAT_OUT_CHANNELS = [16, F_H]     # layers_dict['GAT_hidden_node_sizes'] + [F_H]
F_Z_LIST = [8, 8, 8]
ECONV_MLP_HIDDEN = [32]
ENC_HIDDEN = [32]
OUT_MLP_HIDDEN = [32]
FPS_DIM = 6390           # fixed by fps_MLP(input_size=6390)


def _round_up(x, m):
    return ((x + m - 1) // m) * m


# ----------------------------- Pallas kernels -----------------------------

def _apply_act(y, act):
    if act == "relu":
        return jnp.maximum(y, 0.0)
    if act == "leaky_relu":
        return jnp.where(y > 0, y, 0.2 * y)
    if act == "sigmoid":
        return 1.0 / (1.0 + jnp.exp(-y))
    return y


def _fused_mlp_kernel(*refs, n_layers, act_hidden, act_out):
    # refs = (x, w_0..w_{L-1}, b_0..b_{L-1}, out). All layers of the MLP run in one
    # kernel; inter-layer activations never leave VMEM/vregs.
    x_ref = refs[0]
    w_refs = refs[1:1 + n_layers]
    b_refs = refs[1 + n_layers:1 + 2 * n_layers]
    o_ref = refs[-1]
    h = x_ref[...]
    for l in range(n_layers):
        w = w_refs[l][...]
        # bf16 weights (fps first layer) -> feed MXU in bf16, accumulate in f32.
        lhs = h if w.dtype == jnp.float32 else h.astype(w.dtype)
        h = jnp.dot(lhs, w, preferred_element_type=jnp.float32) + b_refs[l][...]
        h = _apply_act(h, act_out if l == n_layers - 1 else act_hidden)
    o_ref[...] = h


def mlp_forward(prep, x, act_hidden="relu", act_out="none"):
    """Whole MLP (all layers) in ONE pallas_call. Weights/biases are pre-padded at init;
    only the activation x is padded per call. Mirrors MLP.forward (dropout=0 -> no-op)."""
    n = len(prep)
    M, K = x.shape
    Mp = _round_up(M, 8)
    Kp = prep[0]["w"].shape[0]
    xp = jnp.zeros((Mp, Kp), jnp.float32).at[:M, :K].set(x.astype(jnp.float32))
    Np_out = prep[-1]["w"].shape[1]
    inputs = [xp] + [l["w"] for l in prep] + [l["b"] for l in prep]
    out = pl.pallas_call(
        functools.partial(_fused_mlp_kernel, n_layers=n,
                          act_hidden=act_hidden, act_out=act_out),
        out_shape=jax.ShapeDtypeStruct((Mp, Np_out), jnp.float32),
        in_specs=[pl.BlockSpec(memory_space=pltpu.MemorySpace.VMEM)] * len(inputs),
        out_specs=pl.BlockSpec(memory_space=pltpu.MemorySpace.VMEM),
    )(*inputs)
    return out[:M, :prep[-1]["dout"]]


def _gat_attn_kernel(adst_ref, asrc_ref, mask_ref, xp_ref, o_ref):
    # Dense GAT attention, one block of query rows per grid step:
    #   e[i,j] = leaky_relu(a_dst[i] + a_src[j]); softmax over j restricted to
    #   mask[i,j]!=0 (edges j->i plus self-loops); out = alpha @ x'.
    e = adst_ref[...] + asrc_ref[...]          # [tq,1] + [1,Nc] -> [tq,Nc]
    e = jnp.where(e > 0, e, 0.2 * e)           # leaky_relu, negative_slope=0.2
    m = mask_ref[...] != 0                     # int8 mask -> bool
    e = jnp.where(m, e, -1e30)
    mx = jnp.max(e, axis=1, keepdims=True)
    p = jnp.where(m, jnp.exp(e - mx), 0.0)
    denom = jnp.sum(p, axis=1, keepdims=True)
    denom = jnp.where(denom > 0, denom, 1.0)   # guard for fully-padded rows
    alpha = p * pl.reciprocal(denom, approx=True)   # EUP, free next to MXU push
    o_ref[...] = jnp.dot(alpha, xp_ref[...], preferred_element_type=jnp.float32)


def gat_attention(xp, a_src, a_dst, mask_i8):
    """Row-tiled masked attention. Full key dim per row block (exact softmax)."""
    N, C = xp.shape
    tq = min(128, _round_up(N, 32))            # multiple of 32 (int8 sublane tile)
    Nr = _round_up(N, tq)
    Nc = _round_up(N, 128)
    Cp = _round_up(C, 128)
    xpp = jnp.zeros((Nc, Cp), jnp.float32).at[:N, :C].set(xp.astype(jnp.float32))
    asrc = jnp.zeros((1, Nc), jnp.float32).at[0, :N].set(a_src.astype(jnp.float32))
    adst = jnp.zeros((Nr, 1), jnp.float32).at[:N, 0].set(a_dst.astype(jnp.float32))
    maskp = jnp.zeros((Nr, Nc), jnp.int8).at[:N, :N].set(mask_i8)
    out = pl.pallas_call(
        _gat_attn_kernel,
        out_shape=jax.ShapeDtypeStruct((Nr, Cp), jnp.float32),
        grid=(Nr // tq,),
        in_specs=[
            pl.BlockSpec((tq, 1), lambda i: (i, 0)),
            pl.BlockSpec((1, Nc), lambda i: (0, 0)),
            pl.BlockSpec((tq, Nc), lambda i: (i, 0)),
            pl.BlockSpec((Nc, Cp), lambda i: (0, 0)),
        ],
        out_specs=pl.BlockSpec((tq, Cp), lambda i: (i, 0)),
        compiler_params=pltpu.CompilerParams(
            dimension_semantics=("parallel",),            # shard rows over v7x TCs
            vmem_limit_bytes=48 * 1024 * 1024),
    )(adst, asrc, maskp, xpp)
    return out[:N, :C]


def _nnconv_kernel(dst_ref, xs3_ref, w3_ref, x_ref, rw_ref, b_ref, o_ref, *, cin):
    # Fused NNConv: per-edge msg_e = x_src[e] @ W_e, scatter-add to target nodes via
    # an in-kernel one-hot matmul, plus root weight and bias. W indexed along the
    # leading (cin) dim -> sublane-aligned loads, no lane slicing.
    Ep = xs3_ref.shape[1]
    Cp = w3_ref.shape[2]
    msg = jnp.zeros((Ep, Cp), jnp.float32)
    for i in range(cin):                               # statically unrolled (cin=8)
        msg = msg + xs3_ref[i] * w3_ref[i]             # [Ep,1] * [Ep,Cp]
    Nn = o_ref.shape[0]
    dst = dst_ref[...]                                 # [1, Ep] int32 (pad = -1)
    iota = jax.lax.broadcasted_iota(jnp.int32, (Nn, Ep), 0)
    onehot = (iota == dst).astype(jnp.float32)         # [Nn, Ep]
    aggr = jnp.dot(onehot, msg, preferred_element_type=jnp.float32)
    root = jnp.dot(x_ref[...], rw_ref[...], preferred_element_type=jnp.float32)
    o_ref[...] = aggr + root + b_ref[...]


def _segsum_kernel(seg_ref, x_ref, o_ref):
    # global_add_pool: one-hot built IN-kernel from the segment-id row vector.
    seg = seg_ref[...]                                 # [1, Np] int32 (pad = -1)
    S = o_ref.shape[0]
    iota = jax.lax.broadcasted_iota(jnp.int32, (S, seg.shape[1]), 0)
    onehot = (iota == seg).astype(jnp.float32)
    o_ref[...] = jnp.dot(onehot, x_ref[...], preferred_element_type=jnp.float32)


def segment_sum_pallas(x, seg_ids, num_segments):
    """torch_geometric.nn.global_add_pool as one Pallas kernel (no HBM one-hot)."""
    R, F = x.shape
    Rp = _round_up(R, 8)
    Fp = _round_up(F, 128)
    Sp = _round_up(num_segments, 8)
    xp = jnp.zeros((Rp, Fp), jnp.float32).at[:R, :F].set(x.astype(jnp.float32))
    segp = jnp.full((1, Rp), -1, jnp.int32).at[0, :R].set(seg_ids.astype(jnp.int32))
    out = pl.pallas_call(
        _segsum_kernel,
        out_shape=jax.ShapeDtypeStruct((Sp, Fp), jnp.float32),
        in_specs=[pl.BlockSpec(memory_space=pltpu.MemorySpace.VMEM)] * 2,
        out_specs=pl.BlockSpec(memory_space=pltpu.MemorySpace.VMEM),
    )(segp, xp)
    return out[:num_segments, :F]


# ----------------------------- module forwards -----------------------------

def nnconv_forward(p, x, edge_index, edge_attr, cin, cout):
    # torch_geometric NNConv(aggr='add', root_weight=True, bias=True), flow source->target.
    N = x.shape[0]
    E = edge_index.shape[1]
    w_flat = mlp_forward(p["edge_mlp"], edge_attr, "relu", "none")   # [E, cin*cout]
    Ep = _round_up(E, 8)
    Np = _round_up(N, 8)
    Kp = p["root_w"].shape[0]
    Cp = p["root_w"].shape[1]
    w3 = w_flat.reshape(E, cin, cout).transpose(1, 0, 2)             # [cin, E, cout]
    w3p = jnp.zeros((cin, Ep, Cp), jnp.float32).at[:, :E, :cout].set(w3)
    xs = x[edge_index[0]].astype(jnp.float32)                        # gather (glue)
    xs3 = jnp.zeros((cin, Ep, 1), jnp.float32).at[:, :E, 0].set(xs.T)
    dst = jnp.full((1, Ep), -1, jnp.int32).at[0, :E].set(edge_index[1].astype(jnp.int32))
    xpad = jnp.zeros((Np, Kp), jnp.float32).at[:N, :cin].set(x.astype(jnp.float32))
    out = pl.pallas_call(
        functools.partial(_nnconv_kernel, cin=cin),
        out_shape=jax.ShapeDtypeStruct((Np, Cp), jnp.float32),
        in_specs=[pl.BlockSpec(memory_space=pltpu.MemorySpace.VMEM)] * 6,
        out_specs=pl.BlockSpec(memory_space=pltpu.MemorySpace.VMEM),
    )(dst, xs3, w3p, xpad, p["root_w"], p["bias"])
    return out[:N, :cout]


def gat_forward(p, x, edge_index, heads):
    # torch_geometric GATConv(concat=False, negative_slope=0.2, add_self_loops=True).
    N = x.shape[0]
    out_dim = p["att_src"].shape[-1]
    xp = mlp_forward([p["lin"]], x, "none", "none")                  # lin has no bias
    mask = jnp.zeros((N, N), jnp.int8).at[edge_index[1], edge_index[0]].set(1)
    diag = jnp.arange(N)
    mask = mask.at[diag, diag].set(1)                                # add self-loops
    head_outs = []
    for h in range(heads):
        xph = xp[:, h * out_dim:(h + 1) * out_dim]
        a_src = jnp.sum(xph * p["att_src"][h][None, :], axis=1)      # [N]
        a_dst = jnp.sum(xph * p["att_dst"][h][None, :], axis=1)      # [N]
        head_outs.append(gat_attention(xph, a_src, a_dst, mask))
    out = sum(head_outs) / heads                                     # concat=False -> mean
    return out + p["bias"][None, :]


def graph_embedder_forward(p, x, edge_index, edge_attr):
    out = nnconv_forward(p["econv"], x, edge_index, edge_attr, F_H_EMBED, F_H_ECONV)
    for gp in p["gat"]:
        out = gat_forward(gp, out, edge_index, GAT_N_HEADS)
    return out


def _pair_mlp(prep, fwd, rev, act_hidden="relu", act_out="none"):
    # Batch fwd + rev rows into one [2T, feat] matrix -> one kernel launch, then add.
    T = fwd.shape[0]
    out = mlp_forward(prep, jnp.concatenate([fwd, rev], axis=0), act_hidden, act_out)
    return out[:T] + out[T:]


def internal_coord_forward(p, H, distances, distance_indices, phis, phi_indices,
                           psis, psi_indices, node_map, LS_map, alpha_indices,
                           num_mols, num_LS):
    i, j = distance_indices[0], distance_indices[1]
    d = distances[:, None]
    z_D = _pair_mlp(p["D"],
                    jnp.concatenate([H[i], H[j], d], axis=1),
                    jnp.concatenate([H[j], H[i], d], axis=1))

    i3, j3, k3 = phi_indices[0], phi_indices[1], phi_indices[2]
    cphi, sphi = jnp.cos(phis)[:, None], jnp.sin(phis)[:, None]
    z_phi = _pair_mlp(p["phi"],
                      jnp.concatenate([H[i3], H[j3], H[k3], cphi, sphi], axis=1),
                      jnp.concatenate([H[k3], H[j3], H[i3], cphi, sphi], axis=1))

    i4, j4, k4, l4 = psi_indices[0], psi_indices[1], psi_indices[2], psi_indices[3]
    fwd = jnp.concatenate([H[i4], H[j4], H[k4], H[l4]], axis=1)
    rev = jnp.concatenate([H[l4], H[k4], H[j4], H[i4]], axis=1)
    c_tensor = _pair_mlp(p["c"], fwd, rev)
    phase = _pair_mlp(p["shift"], fwd, rev)

    phase_shift_norm = jnp.linalg.norm(phase, ord=2, axis=1, keepdims=True)
    phase_n = phase / jnp.maximum(phase_shift_norm, 1e-12)
    phase_cos = phase_n[:, 0]
    phase_sin = phase_n[:, 1]
    normalized_c = jax.nn.sigmoid(c_tensor[:, 0:1])       # robust for single dihedral

    cpsi, spsi = jnp.cos(psis)[:, None], jnp.sin(psis)[:, None]
    scaled_torsions = jnp.concatenate(
        [cpsi * phase_cos[:, None] - spsi * phase_sin[:, None],
         spsi * phase_cos[:, None] + cpsi * phase_sin[:, None]], axis=1) * normalized_c
    pooled_sums = segment_sum_pallas(scaled_torsions, LS_map, num_LS)
    radii = jnp.linalg.norm(pooled_sums, ord=2, axis=1)

    xa, ya = alpha_indices[0], alpha_indices[1]
    r = radii[:, None]
    z_alpha = _pair_mlp(p["alpha"],
                        jnp.concatenate([H[xa], H[ya], r], axis=1),
                        jnp.concatenate([H[ya], H[xa], r], axis=1))

    z_D_pooled = segment_sum_pallas(z_D, node_map[i], num_mols)
    z_phi_pooled = segment_sum_pallas(z_phi, node_map[i3], num_mols)
    z_alpha_pooled = segment_sum_pallas(z_alpha, node_map[xa], num_mols)
    z = jnp.concatenate([z_D_pooled, z_phi_pooled, z_alpha_pooled], axis=1)

    sin_cos_psi = jnp.concatenate([cpsi, spsi], axis=1)
    return (z, phase_shift_norm, z_alpha, c_tensor, phase_cos, phase_sin,
            sin_cos_psi, pooled_sums)


def encoder_forward(params, data, LS_map, alpha_indices, num_mols, num_LS):
    H = graph_embedder_forward(params["graph"], data["x"], data["edge_index"],
                               data["edge_attr"])
    (latent_vector, phase_shift_norm, z_alpha, c_tensor, phase_cos, phase_sin,
     sin_cos_psi, sin_cos_alpha) = internal_coord_forward(
        params["ice"], H, data["bond_distances"], data["bond_distance_index"],
        data["bond_angles"], data["bond_angle_index"],
        data["dihedral_angles"], data["dihedral_angle_index"],
        data["batch"], LS_map, alpha_indices, num_mols, num_LS)

    mol_embedding = segment_sum_pallas(H, data["batch"], num_mols)
    embedding = jnp.concatenate(
        [mol_embedding, latent_vector,
         data["charge"][:, None], data["rotate_num"][:, None],
         data["atom_num"][:, None], data["mol_weight"][:, None],
         data["ring_num"][:, None]], axis=1)
    output1 = mlp_forward(params["output_mlp"], embedding)
    output2 = mlp_forward(params["fps_mlp"], data["fps"])
    return (output1, output2, latent_vector, phase_shift_norm, z_alpha,
            mol_embedding, c_tensor, phase_cos, phase_sin, sin_cos_psi, sin_cos_alpha)


# ----------------------------- parameter init (pre-padded once) -----------------------------

def init_linear(key, din, dout):
    kw, kb = jax.random.split(key)
    w = jax.random.normal(kw, (din, dout), jnp.float32) * 0.1
    b = jax.random.normal(kb, (dout,), jnp.float32) * 0.01
    return (w, b)


def init_mlp(key, din, dout, hidden):
    sizes = [din] + list(hidden) + [dout]
    ks = jax.random.split(key, len(sizes) - 1)
    return [init_linear(k, a, b) for k, a, b in zip(ks, sizes[:-1], sizes[1:])]


def prepare_linear(w, b, weight_dtype=jnp.float32):
    # Pad W to (Kp,Np)=(x128,x128) and b to (1,Np) ONCE; kernels consume padded tensors.
    K, N = w.shape
    Kp, Np = _round_up(K, 128), _round_up(N, 128)
    wp = jnp.zeros((Kp, Np), weight_dtype).at[:K, :N].set(w.astype(weight_dtype))
    bp = jnp.zeros((1, Np), jnp.float32).at[0, :N].set(b.astype(jnp.float32))
    return {"w": wp, "b": bp, "din": K, "dout": N}


def prepare_mlp(layers, first_layer_dtype=jnp.float32):
    out = []
    for idx, (w, b) in enumerate(layers):
        dt = first_layer_dtype if idx == 0 else jnp.float32
        out.append(prepare_linear(w, b, dt))
    return out


def init_params(key):
    ks = jax.random.split(key, 12)
    root_w = jax.random.normal(ks[1], (F_H_EMBED, F_H_ECONV), jnp.float32) * 0.1
    econ_kp, econ_np = _round_up(F_H_EMBED, 128), _round_up(F_H_ECONV, 128)
    econv = {
        "edge_mlp": prepare_mlp(init_mlp(ks[0], F_E_EMBED, F_H_EMBED * F_H_ECONV,
                                         ECONV_MLP_HIDDEN)),
        "root_w": jnp.zeros((econ_kp, econ_np), jnp.float32)
                     .at[:F_H_EMBED, :F_H_ECONV].set(root_w),
        "bias": jnp.zeros((1, econ_np), jnp.float32),
    }
    gat = []
    dims = [F_H_ECONV] + GAT_OUT_CHANNELS
    for li in range(len(GAT_OUT_CHANNELS)):
        kk = jax.random.split(ks[2 + li], 3)
        cin, cout = dims[li], dims[li + 1]
        lin_w = jax.random.normal(kk[0], (cin, GAT_N_HEADS * cout), jnp.float32) * 0.1
        gat.append({
            "lin": prepare_linear(lin_w, jnp.zeros((GAT_N_HEADS * cout,), jnp.float32)),
            "att_src": jax.random.normal(kk[1], (GAT_N_HEADS, cout), jnp.float32) * 0.1,
            "att_dst": jax.random.normal(kk[2], (GAT_N_HEADS, cout), jnp.float32) * 0.1,
            "bias": jnp.zeros((cout,), jnp.float32),
        })
    ice = {
        "D": prepare_mlp(init_mlp(ks[4], 2 * F_H + 1, F_Z_LIST[0], ENC_HIDDEN)),
        "phi": prepare_mlp(init_mlp(ks[5], 3 * F_H + 2, F_Z_LIST[1], ENC_HIDDEN)),
        "c": prepare_mlp(init_mlp(ks[6], 4 * F_H, 1, ENC_HIDDEN)),
        "shift": prepare_mlp(init_mlp(ks[7], 4 * F_H, 2, ENC_HIDDEN)),
        "alpha": prepare_mlp(init_mlp(ks[8], 2 * F_H + 1, F_Z_LIST[2], ENC_HIDDEN)),
    }
    out_mlp = prepare_mlp(init_mlp(ks[9], F_H + sum(F_Z_LIST) + 5, 1, OUT_MLP_HIDDEN))
    # fps first layer weight in bf16: halves the dominant 6400x128 HBM->VMEM DMA.
    fps_mlp = prepare_mlp(init_mlp(ks[10], FPS_DIM, 1, OUT_MLP_HIDDEN),
                          first_layer_dtype=jnp.bfloat16)
    return {"graph": {"econv": econv, "gat": gat}, "ice": ice,
            "output_mlp": out_mlp, "fps_mlp": fps_mlp}


# ----------------------------- demo / smoke test -----------------------------

if __name__ == "__main__":
    key = jax.random.PRNGKey(0)
    kp, kd = jax.random.split(key)
    params = init_params(kp)

    N, B = 12, 2                       # 2 molecules x 6 atoms
    dkeys = jax.random.split(kd, 12)

    # bidirectional chain within each molecule
    src0 = jnp.array([0, 1, 1, 2, 2, 3, 3, 4, 4, 5], jnp.int32)
    dst0 = jnp.array([1, 0, 2, 1, 3, 2, 4, 3, 5, 4], jnp.int32)
    edge_index = jnp.stack([jnp.concatenate([src0, src0 + 6]),
                            jnp.concatenate([dst0, dst0 + 6])])            # [2, 20]

    di0 = jnp.array([0, 1, 2, 3, 4], jnp.int32)
    distance_index = jnp.stack([jnp.concatenate([di0, di0 + 6]),
                                jnp.concatenate([di0 + 1, di0 + 7])])      # [2, 10]
    pa0 = jnp.array([0, 1, 2, 3], jnp.int32)
    phi_index = jnp.stack([jnp.concatenate([pa0, pa0 + 6]),
                           jnp.concatenate([pa0 + 1, pa0 + 7]),
                           jnp.concatenate([pa0 + 2, pa0 + 8])])           # [3, 8]
    qa0 = jnp.array([0, 1, 2], jnp.int32)
    psi_index = jnp.stack([jnp.concatenate([qa0, qa0 + 6]),
                           jnp.concatenate([qa0 + 1, qa0 + 7]),
                           jnp.concatenate([qa0 + 2, qa0 + 8]),
                           jnp.concatenate([qa0 + 3, qa0 + 9])])           # [4, 6]

    data = {
        "x": jax.random.normal(dkeys[0], (N, F_H_EMBED), jnp.float32),
        "edge_index": edge_index,
        "edge_attr": jax.random.normal(dkeys[1], (edge_index.shape[1], F_E_EMBED), jnp.float32),
        "bond_distances": jax.random.uniform(dkeys[2], (10,), jnp.float32, 1.0, 2.0),
        "bond_distance_index": distance_index,
        "bond_angles": jax.random.uniform(dkeys[3], (8,), jnp.float32, 0.0, 3.1),
        "bond_angle_index": phi_index,
        "dihedral_angles": jax.random.uniform(dkeys[4], (6,), jnp.float32, -3.1, 3.1),
        "dihedral_angle_index": psi_index,
        "batch": jnp.concatenate([jnp.zeros(6, jnp.int32), jnp.ones(6, jnp.int32)]),
        "charge": jax.random.normal(dkeys[5], (B,), jnp.float32),
        "rotate_num": jax.random.normal(dkeys[6], (B,), jnp.float32),
        "atom_num": jax.random.normal(dkeys[7], (B,), jnp.float32),
        "mol_weight": jax.random.normal(dkeys[8], (B,), jnp.float32),
        "ring_num": jax.random.normal(dkeys[9], (B,), jnp.float32),
        "fps": jax.random.normal(dkeys[10], (B, FPS_DIM), jnp.float32),
    }
    LS_map = jnp.array([0, 0, 1, 2, 2, 3], jnp.int32)                      # 4 local structures
    alpha_indices = jnp.array([[1, 2, 7, 8], [2, 3, 8, 9]], jnp.int32)

    outs = encoder_forward(params, data, LS_map, alpha_indices, num_mols=B, num_LS=4)
    outs = jax.block_until_ready(outs)

    assert all(bool(jnp.all(jnp.isfinite(o))) for o in outs)
    assert outs[0].shape == (B, 1) and outs[1].shape == (B, 1)
    assert outs[2].shape == (B, sum(F_Z_LIST)) and outs[5].shape == (B, F_H)
    # TODO(synk): PyG GAT softmax over duplicated parallel edges is collapsed by the
    # dense-adjacency attention kernel (identical for simple graphs, as used here).
    print("KERNEL_OK")
</pallas_src>

<mosaic_0001>
module attributes {stable_mosaic.version = 11 : i64} {
  func.func @_fused_mlp_kernel(%arg0: memref<24x128xf32, #tpu.memory_space<vmem>>, %arg1: memref<128x128xf32, #tpu.memory_space<vmem>>, %arg2: memref<128x128xf32, #tpu.memory_space<vmem>>, %arg3: memref<1x128xf32, #tpu.memory_space<vmem>>, %arg4: memref<1x128xf32, #tpu.memory_space<vmem>>, %arg5: memref<24x128xf32, #tpu.memory_space<vmem>>) attributes {dimension_semantics = [], scalar_prefetch = 0 : i64, scratch_operands = 0 : i64, tpu.core_type = #tpu.core_type<tc>} {
    %c0 = arith.constant 0 : index
    %c0_0 = arith.constant 0 : index
    %0 = vector.load %arg0[%c0, %c0_0] : memref<24x128xf32, #tpu.memory_space<vmem>>, vector<24x128xf32>
    %c0_1 = arith.constant 0 : index
    %c0_2 = arith.constant 0 : index
    %1 = vector.load %arg1[%c0_1, %c0_2] : memref<128x128xf32, #tpu.memory_space<vmem>>, vector<128x128xf32>
    %cst = arith.constant dense<0.000000e+00> : vector<24x128xf32>
    %2 = tpu.matmul %0, %1, %cst {dimension_numbers = #tpu.dot_dimension_numbers<[1], [0], [0], [1], [0, 0, 1, 1], [], []>} : vector<24x128xf32>, vector<128x128xf32>, vector<24x128xf32> -> vector<24x128xf32>
    %c0_3 = arith.constant 0 : index
    %c0_4 = arith.constant 0 : index
    %3 = vector.load %arg3[%c0_3, %c0_4] : memref<1x128xf32, #tpu.memory_space<vmem>>, vector<1x128xf32>
    %4 = vector.broadcast %3 : vector<1x128xf32> to vector<24x128xf32>
    %5 = arith.addf %2, %4 : vector<24x128xf32>
    %cst_5 = arith.constant 0.000000e+00 : f32
    %6 = vector.broadcast %cst_5 : f32 to vector<24x128xf32>
    %7 = arith.maximumf %5, %6 : vector<24x128xf32>
    %c0_6 = arith.constant 0 : index
    %c0_7 = arith.constant 0 : index
    %8 = vector.load %arg2[%c0_6, %c0_7] : memref<128x128xf32, #tpu.memory_space<vmem>>, vector<128x128xf32>
    %cst_8 = arith.constant dense<0.000000e+00> : vector<24x128xf32>
    %9 = tpu.matmul %7, %8, %cst_8 {dimension_numbers = #tpu.dot_dimension_numbers<[1], [0], [0], [1], [0, 0, 1, 1], [], []>} : vector<24x128xf32>, vector<128x128xf32>, vector<24x128xf32> -> vector<24x128xf32>
    %c0_9 = arith.constant 0 : index
    %c0_10 = arith.constant 0 : index
    %10 = vector.load %arg4[%c0_9, %c0_10] : memref<1x128xf32, #tpu.memory_space<vmem>>, vector<1x128xf32>
    %11 = vector.broadcast %10 : vector<1x128xf32> to vector<24x128xf32>
    %12 = arith.addf %9, %11 : vector<24x128xf32>
    %c0_11 = arith.constant 0 : index
    %c0_12 = arith.constant 0 : index
    %13 = vector.load %arg5[%c0_11, %c0_12] : memref<24x128xf32, #tpu.memory_space<vmem>>, vector<24x128xf32>
    tpu.vector_store %arg5[%c0_11, %c0_12], %12 {strides = array<i32>} : memref<24x128xf32, #tpu.memory_space<vmem>>, vector<24x128xf32>,
    return
  }
}

</mosaic_0001>

<llo_original>
// kernel: tpu_custom_call.1
$region0: #{tpu_custom_call.1}
  #allocation0 [shape = 'u32[]', space=smem, size = 0x4, offset = 0x4, fixed_abs, tag = 'smem constant byte address 0x4 - core index']
  #allocation1 [shape = 'u32[72,128]{1,0:T(1,128)}', space=vmem, size = 0x9000, scoped, tag = 'internal scratch']
  %s0 = inlined_call_operand.hbm [shape: f32[24,128], index: 0, kind: input, shape index: {}]
  %s1 = inlined_call_operand.hbm [shape: f32[128,128], index: 1, kind: input, shape index: {}]
  %s2 = inlined_call_operand.hbm [shape: f32[128,128], index: 2, kind: input, shape index: {}]
  %s3 = inlined_call_operand.vmem [shape: f32[1,128], index: 3, kind: input, shape index: {}]
  %s4 = inlined_call_operand.vmem [shape: f32[1,128], index: 4, kind: input, shape index: {}]
  %s5 = inlined_call_operand.hbm [shape: f32[24,128], index: 5, kind: output, shape index: {}]
  %s6 = sld [smem:[#allocation0]]
  $region42: #{tpu_custom_call.1} parent=0
    _
  %s8 = ssub.s32 1, %s6
  %s9 = scalar_select 0, %s8, %s6
  $region1: #{tpu_custom_call.1} parent=0
    #allocation2 [shape = 'u8[12288]{0}', space=vmem, size = 0x3000, scoped, tag = 'input window, operand 0, single buffered']
    #allocation3 [shape = 's32[1]{0}', space=sflag, size = 0x4, scoped, tag = 'scoped memory for tpu_custom_call.1']
    #allocation4 [shape = 's32[1]{0}', space=sflag, size = 0x4, scoped, tag = 'scoped memory for tpu_custom_call.1']
    #allocation5 [shape = 'u8[65536]{0}', space=vmem, size = 0x10000, scoped, tag = 'input window, operand 1, single buffered']
    #allocation6 [shape = 's32[1]{0}', space=sflag, size = 0x4, scoped, tag = 'scoped memory for tpu_custom_call.1']
    #allocation7 [shape = 'u8[65536]{0}', space=vmem, size = 0x10000, scoped, tag = 'input window, operand 2, single buffered']
    #allocation8 [shape = 'u8[12288]{0}', space=vmem, size = 0x3000, scoped, tag = 'output window, operand 0, single buffered']
    %10 = vsyncpa [#allocation3], 0
    %11 = vsyncpa [#allocation6], 0
    %12 = vsyncpa [#allocation4], 0
    // Predicated region
    $region2: #{tpu_custom_call.1} parent=1 // pred_check
      _
    $region3: #{tpu_custom_call.1} parent=1 // pred_check_branch
      %14 = sbr.rel (0) target = $region5
    $region4: #{tpu_custom_call.1} parent=1 // pred_region
      %16 = vsyncadd [#allocation3], 0
      %s17 = sshll.u32 %s0, 4
      %s18 = int_to_ptr.hbm [resolvable:$true] %s17
      %s19 = sshll.u32 [#allocation2], 4
      %s20 = int_to_ptr.vmem [resolvable:$true] %s19
      %25 = dma.hbm_to_vmem [thread:$0]  %s18, 384, %s20, [#allocation3], 128, 128, 8
    $region5: #{tpu_custom_call.1} parent=1 // pred_fallthru
      _
    // Predicated region
    $region6: #{tpu_custom_call.1} parent=1 // pred_check
      _
    $region7: #{tpu_custom_call.1} parent=1 // pred_check_branch
      %27 = sbr.rel (0) target = $region9
    $region8: #{tpu_custom_call.1} parent=1 // pred_region
      %29 = vsyncadd [#allocation6], 0
      %s30 = sshll.u32 %s1, 4
      %s31 = int_to_ptr.hbm [resolvable:$true] %s30
      %s32 = sshll.u32 [#allocation5], 4
      %s33 = int_to_ptr.vmem [resolvable:$true] %s32
      %38 = dma.hbm_to_vmem [thread:$0]  %s31, 2048, %s33, [#allocation6], 128, 128, 8
    $region9: #{tpu_custom_call.1} parent=1 // pred_fallthru
      _
    // Predicated region
    $region10: #{tpu_custom_call.1} parent=1 // pred_check
      _
    $region11: #{tpu_custom_call.1} parent=1 // pred_check_branch
      %40 = sbr.rel (0) target = $region13
    $region12: #{tpu_custom_call.1} parent=1 // pred_region
      %42 = vsyncadd [#allocation6], 0
      %s43 = sshll.u32 %s2, 4
      %s44 = int_to_ptr.hbm [resolvable:$true] %s43
      %s45 = sshll.u32 [#allocation7], 4
      %s46 = int_to_ptr.vmem [resolvable:$true] %s45
      %51 = dma.hbm_to_vmem [thread:$0]  %s44, 2048, %s46, [#allocation6], 128, 128, 8
    $region13: #{tpu_custom_call.1} parent=1 // pred_fallthru
      _
    // Predicated region
    $region14: #{tpu_custom_call.1} parent=1 // pred_check
      _
    $region15: #{tpu_custom_call.1} parent=1 // pred_check_branch
      %53 = sbr.rel (0) target = $region17
    $region16: #{tpu_custom_call.1} parent=1 // pred_region
      _
    $region17: #{tpu_custom_call.1} parent=1 // pred_fallthru
      _
    // Predicated region
    $region18: #{tpu_custom_call.1} parent=1 // pred_check
      _
    $region19: #{tpu_custom_call.1} parent=1 // pred_check_branch
      %55 = sbr.rel (0) target = $region21
    $region20: #{tpu_custom_call.1} parent=1 // pred_region
      _
    $region21: #{tpu_custom_call.1} parent=1 // pred_fallthru
      _
    // Predicated region
    $region22: #{tpu_custom_call.1} parent=1 // pred_check
      _
    $region23: #{tpu_custom_call.1} parent=1 // pred_check_branch
      %57 = sbr.rel (0) target = $region25
    $region24: #{tpu_custom_call.1} parent=1 // pred_region
      %59 = dma.done [#allocation3], 384
    $region25: #{tpu_custom_call.1} parent=1 // pred_fallthru
      _
    // Predicated region
    $region26: #{tpu_custom_call.1} parent=1 // pred_check
      _
    $region27: #{tpu_custom_call.1} parent=1 // pred_check_branch
      %61 = sbr.rel (0) target = $region29
    $region28: #{tpu_custom_call.1} parent=1 // pred_region
      %63 = dma.done [#allocation6], 2048
    $region29: #{tpu_custom_call.1} parent=1 // pred_fallthru
      _
    // Predicated region
    $region30: #{tpu_custom_call.1} parent=1 // pred_check
      _
    $region31: #{tpu_custom_call.1} parent=1 // pred_check_branch
      %65 = sbr.rel (0) target = $region33
    $region32: #{tpu_custom_call.1} parent=1 // pred_region
      %67 = dma.done [#allocation6], 2048
    $region33: #{tpu_custom_call.1} parent=1 // pred_fallthru
      _
    %v68 = vld [vmem:[#allocation2] sm:$0xff]
    %v69 = vld [vmem:[#allocation2 + $0x8] sm:$0xff]
    %v70 = vld [vmem:[#allocation2 + $0x10] sm:$0xff]
    %v71 = vld [vmem:[#allocation5] sm:$0xff]
    %v72 = vld [vmem:[#allocation5 + $0x8] sm:$0xff]
    %v73 = vld [vmem:[#allocation5 + $0x10] sm:$0xff]
    %v74 = vld [vmem:[#allocation5 + $0x18] sm:$0xff]
    %v75 = vld [vmem:[#allocation5 + $0x20] sm:$0xff]
    %v76 = vld [vmem:[#allocation5 + $0x28] sm:$0xff]
    %v77 = vld [vmem:[#allocation5 + $0x30] sm:$0xff]
    %v78 = vld [vmem:[#allocation5 + $0x38] sm:$0xff]
    %v79 = vld [vmem:[#allocation5 + $0x40] sm:$0xff]
    %v80 = vld [vmem:[#allocation5 + $0x48] sm:$0xff]
    %v81 = vld [vmem:[#allocation5 + $0x50] sm:$0xff]
    %v82 = vld [vmem:[#allocation5 + $0x58] sm:$0xff]
    %v83 = vld [vmem:[#allocation5 + $0x60] sm:$0xff]
    %v84 = vld [vmem:[#allocation5 + $0x68] sm:$0xff]
    %v85 = vld [vmem:[#allocation5 + $0x70] sm:$0xff]
    %v86 = vld [vmem:[#allocation5 + $0x78] sm:$0xff]
    %v87 = vld [vmem:[%s3] sm:$0x1]
    %v89 = vperm.slane %v87, 0
    %91 = vmatpush.msra.mxu0 %v86
    %92 = vmatpush.msra.mxu0 %v85
    %93 = vmatpush.msra.mxu0 %v84
    %94 = vmatpush.msra.mxu0 %v83
    %95 = vmatpush.msra.mxu0 %v82
    %96 = vmatpush.msra.mxu0 %v81
    %97 = vmatpush.msra.mxu0 %v80
    %98 = vmatpush.msra.mxu0 %v79
    %99 = vmatpush.msra.mxu0 %v78
    %100 = vmatpush.msra.mxu0 %v77
    %101 = vmatpush.msra.mxu0 %v76
    %102 = vmatpush.msra.mxu0 %v75
    %103 = vmatpush.msra.mxu0 %v74
    %104 = vmatpush.msra.mxu0 %v73
    %105 = vmatpush.msra.mxu0 %v72
    %106 = vmatpush.msra.mxu0 %v71
    %107 = vmatmul.f32.gmra.mxu0 %v68
    %v108 = vpop.f32.mrf.mxu0
    %v109 = vadd.f32 %v89, %v108
    %110 = vmatmul.f32.gmra.mxu0 %v69
    %v111 = vpop.f32.mrf.mxu0
    %v112 = vadd.f32 %v89, %v111
    %113 = vmatmul.f32.gmra.mxu0 %v70
    %v114 = vpop.f32.mrf.mxu0
    %v115 = vadd.f32 %v89, %v114
    %116 = vdwg.mxu0
    %v117 = vmax.f32 %v109, 0.0
    %v118 = vmax.f32 %v112, 0.0
    %v119 = vmax.f32 %v115, 0.0
    %v120 = vld [vmem:[#allocation7] sm:$0xff]
    %v121 = vld [vmem:[#allocation7 + $0x8] sm:$0xff]
    %v122 = vld [vmem:[#allocation7 + $0x10] sm:$0xff]
    %v123 = vld [vmem:[#allocation7 + $0x18] sm:$0xff]
    %v124 = vld [vmem:[#allocation7 + $0x20] sm:$0xff]
    %v125 = vld [vmem:[#allocation7 + $0x28] sm:$0xff]
    %v126 = vld [vmem:[#allocation7 + $0x30] sm:$0xff]
    %v127 = vld [vmem:[#allocation7 + $0x38] sm:$0xff]
    %v128 = vld [vmem:[#allocation7 + $0x40] sm:$0xff]
    %v129 = vld [vmem:[#allocation7 + $0x48] sm:$0xff]
    %v130 = vld [vmem:[#allocation7 + $0x50] sm:$0xff]
    %v131 = vld [vmem:[#allocation7 + $0x58] sm:$0xff]
    %v132 = vld [vmem:[#allocation7 + $0x60] sm:$0xff]
    %v133 = vld [vmem:[#allocation7 + $0x68] sm:$0xff]
    %v134 = vld [vmem:[#allocation7 + $0x70] sm:$0xff]
    %v135 = vld [vmem:[#allocation7 + $0x78] sm:$0xff]
    %v136 = vld [vmem:[%s4] sm:$0x1]
    %v138 = vperm.slane %v136, 0
    %140 = vmatpush.msra.mxu0 %v135
    %141 = vmatpush.msra.mxu0 %v134
    %142 = vmatpush.msra.mxu0 %v133
    %143 = vmatpush.msra.mxu0 %v132
    %144 = vmatpush.msra.mxu0 %v131
    %145 = vmatpush.msra.mxu0 %v130
    %146 = vmatpush.msra.mxu0 %v129
    %147 = vmatpush.msra.mxu0 %v128
    %148 = vmatpush.msra.mxu0 %v127
    %149 = vmatpush.msra.mxu0 %v126
    %150 = vmatpush.msra.mxu0 %v125
    %151 = vmatpush.msra.mxu0 %v124
    %152 = vmatpush.msra.mxu0 %v123
    %153 = vmatpush.msra.mxu0 %v122
    %154 = vmatpush.msra.mxu0 %v121
    %155 = vmatpush.msra.mxu0 %v120
    %156 = vmatmul.f32.gmra.mxu0 %v117
    %v157 = vpop.f32.mrf.mxu0
    %v158 = vadd.f32 %v138, %v157
    %159 = vmatmul.f32.gmra.mxu0 %v118
    %v160 = vpop.f32.mrf.mxu0
    %v161 = vadd.f32 %v138, %v160
    %162 = vmatmul.f32.gmra.mxu0 %v119
    %v163 = vpop.f32.mrf.mxu0
    %v164 = vadd.f32 %v138, %v163
    %165 = vdwg.mxu0
    %166 = vst [vmem:[#allocation8] sm:$0xff] %v158
    %167 = vst [vmem:[#allocation8 + $0x8] sm:$0xff] %v161
    %168 = vst [vmem:[#allocation8 + $0x10] sm:$0xff] %v164
    // Predicated region
    $region34: #{tpu_custom_call.1} parent=1 // pred_check
      _
    $region35: #{tpu_custom_call.1} parent=1 // pred_check_branch
      %170 = sbr.rel (0) target = $region37
    $region36: #{tpu_custom_call.1} parent=1 // pred_region
      %172 = vsyncadd [#allocation4], 0
      %s173 = sshll.u32 [#allocation8], 4
      %s174 = int_to_ptr.vmem [resolvable:$true] %s173
      %s175 = sshll.u32 %s5, 4
      %s176 = int_to_ptr.hbm [resolvable:$true] %s175
      %181 = dma.vmem_to_hbm [thread:$0]  %s174, 384, %s176, [#allocation4], 128, 128, 8
    $region37: #{tpu_custom_call.1} parent=1 // pred_fallthru
      _
    // Predicated region
    $region38: #{tpu_custom_call.1} parent=1 // pred_check
      _
    $region39: #{tpu_custom_call.1} parent=1 // pred_check_branch
      %183 = sbr.rel (0) target = $region41
    $region40: #{tpu_custom_call.1} parent=1 // pred_region
      %185 = dma.done [#allocation4], 384
    $region41: #{tpu_custom_call.1} parent=1 // pred_fallthru
      _
    %186 = vsyncpa [#allocation3], 1
    %187 = vsyncpa [#allocation6], 1
    %188 = vsyncpa [#allocation4], 1

</llo_original>
